<compile_context>
chip_gen: v7x
topology: tpu7x:2x2x1
jax: 0.10.0
libtpu: 0.0.40
codegen_flags: <defaults>
</compile_context>

<pallas_src>
import functools

import jax
import jax.numpy as jnp
from jax.experimental import pallas as pl
from jax.experimental.pallas import tpu as pltpu


_NUM = 100          # number of range candidates swept per observation
_ZP_UNROLL = 2      # zero-point loop unroll factor (2D sweep)
_TILE_ROWS = 2048   # x streamed as (2048, 128) f32 tiles (1 MiB per buffer)


# --------------------------------------------------------------------------
# Candidate parameterization, shared by the kernel (traced SMEM scalars) and
# the JAX wrapper (argmin reconstruction) so both use identical f32 formulas.
# --------------------------------------------------------------------------
def _candidate_bounds_2d(x_min, x_max, fi, zf, qrange, num):
    tmp_max = (x_max - x_min) / jnp.float32(num) * fi
    tmp_delta = tmp_max / jnp.float32(qrange)
    new_min = jnp.maximum(jnp.float32(0.0) - zf * tmp_delta, x_min)
    new_max = jnp.minimum(tmp_max - zf * tmp_delta, x_max)
    return new_min, new_max


def _candidate_bounds_1d(x_min, x_max, fi, mode, num):
    xrange = jnp.maximum(jnp.abs(x_min), x_max)
    thres = xrange / jnp.float32(num) * fi
    new_min = jnp.float32(0.0) if mode == "pos" else -thres
    new_max = jnp.float32(0.0) if mode == "neg" else thres
    return new_min, new_max


# --------------------------------------------------------------------------
# Kernel: one grid step == (row-tile t, candidate i).
#   axis 0 (row tiles)  : OUTER, 'arbitrary' -- x tile resident across the
#                         inner candidate sweep (no re-DMA while i varies)
#   axis 1 (candidates) : INNER, 'arbitrary' -- each candidate accumulates its
#                         own row of the resident (num, ncols) output block
# --------------------------------------------------------------------------
def _mse_sweep_kernel(stat_ref, x_ref, out_ref, *, mode, quant_min, quant_max,
                      num, inv_n):
    t = pl.program_id(0)                       # row-tile index (reduction)
    i = pl.program_id(1)                       # candidate index 0..num-1
    x_min = stat_ref[0]
    x_max = stat_ref[1]
    qrange = float(quant_max - quant_min)
    fi = (i + 1).astype(jnp.float32)
    x = x_ref[...]
    ncols = out_ref.shape[-1]

    def sq_err(new_min, new_max):
        # calculate_qparams (asymmetric/affine) with the zero-point folded into
        # the clip bounds and the scale factored out of the element loop:
        #   fake_quant(x) - x == (clip(round(x/s), qmin-zp, qmax-zp) - x/s) * s
        min_neg = jnp.minimum(new_min, jnp.float32(0.0))
        max_pos = jnp.maximum(new_max, jnp.float32(0.0))
        scale = jnp.maximum((max_pos - min_neg) / qrange, jnp.float32(1e-8))
        inv_s = jnp.float32(1.0) / scale
        zero_point = jnp.clip(quant_min - jnp.round(min_neg / scale),
                              quant_min, quant_max)
        lo = quant_min - zero_point
        hi = quant_max - zero_point
        y = x * inv_s
        d = jnp.clip(jnp.round(y), lo, hi) - y
        # zero padding contributes exactly 0 (clip(0, lo<=0, hi>=0) == 0);
        # the constant 1/N keeps the f32 accumulation well conditioned and is
        # argmin-invariant.
        return jnp.sum(d * d) * (scale * scale * jnp.float32(inv_n))

    if mode == "2d":
        nzp = quant_max - quant_min + 1
        lane = jax.lax.broadcasted_iota(jnp.int32, (1, ncols), 1)

        def eval_zp(zi, scores):
            zf = (zi + quant_min).astype(jnp.float32)
            new_min, new_max = _candidate_bounds_2d(x_min, x_max, fi, zf,
                                                    qrange, num)
            s = sq_err(new_min, new_max)
            return jnp.where(lane == zi, s, scores)

        def body(j, scores):
            zi0 = j * _ZP_UNROLL
            for u in range(_ZP_UNROLL):
                scores = eval_zp(zi0 + u, scores)
            return scores

        main = (nzp // _ZP_UNROLL) * _ZP_UNROLL
        scores = jax.lax.fori_loop(0, main // _ZP_UNROLL, body,
                                   jnp.zeros((1, ncols), jnp.float32))
        for zi in range(main, nzp):            # static remainder (empty for 8-bit)
            scores = eval_zp(jnp.int32(zi), scores)
    else:
        new_min, new_max = _candidate_bounds_1d(x_min, x_max, fi, mode, num)
        scores = jnp.zeros((1, ncols), jnp.float32) + sq_err(new_min, new_max)

    row = pl.ds(i, 1)

    @pl.when(t == 0)                           # first tile: initialize this row
    def _():
        out_ref[row, :] = scores

    @pl.when(t > 0)                            # later tiles: accumulate into it
    def _():
        out_ref[row, :] += scores


# --------------------------------------------------------------------------
# Wrapper: pad/reshape to lane-dense (R, 128), run the sweep, argmin in JAX.
# --------------------------------------------------------------------------
@functools.partial(
    jax.jit,
    static_argnames=("mode", "quant_min", "quant_max", "num", "tile_rows"))
def mse_search_pallas(x, x_min, x_max, *, mode, quant_min, quant_max, num,
                      tile_rows=_TILE_ROWS):
    """Dense MSE sweep; returns (best_min, best_max) as device f32 scalars."""
    flat = x.reshape(-1)
    if flat.dtype != jnp.float32:
        flat = flat.astype(jnp.float32)
    n = flat.shape[0]
    rows = -(-n // 128)
    if rows <= tile_rows:
        tr = max(8, -(-rows // 8) * 8)         # single tile, rows rounded to x8
        n_tiles = 1
    else:
        tr = tile_rows
        n_tiles = -(-rows // tr)
    total = tr * n_tiles * 128
    if total > n:
        # TODO(synk): pad only the ragged tail (or mask it in-kernel) to avoid
        # a full extra read+write of x on HBM-limited chips (v5e).
        flat = jnp.pad(flat, (0, total - n))   # zero pad contributes 0 error
    xr = flat.reshape(tr * n_tiles, 128)

    x_min = jnp.asarray(x_min, jnp.float32)
    x_max = jnp.asarray(x_max, jnp.float32)
    stats = jnp.stack([x_min, x_max])

    qrange = float(quant_max - quant_min)
    nzp = quant_max - quant_min + 1
    # lane width of one per-candidate score row (multiple of 128 -> dense stores)
    ncols = -(-nzp // 128) * 128 if mode == "2d" else 128

    kernel = functools.partial(_mse_sweep_kernel, mode=mode,
                               quant_min=quant_min, quant_max=quant_max,
                               num=num, inv_n=1.0 / float(total))
    grid_spec = pltpu.PrefetchScalarGridSpec(
        num_scalar_prefetch=1,
        # Tiles OUTER, candidates INNER: the x block index depends only on t,
        # so the tile is DMA'd once and reused for all `num` candidates.
        grid=(n_tiles, num),
        in_specs=[pl.BlockSpec((tr, 128), lambda t, i, s: (t, 0))],
        # Single resident output block (constant index): accumulated in VMEM
        # across the whole grid, written to HBM once at the end.
        out_specs=pl.BlockSpec((num, ncols), lambda t, i, s: (0, 0)),
    )
    zps = nzp if mode == "2d" else 1
    cost = pl.CostEstimate(
        flops=int(num) * int(zps) * 7 * int(total),
        transcendentals=0,
        bytes_accessed=int(total) * 4 + int(num) * int(ncols) * 4,
    )
    scores = pl.pallas_call(
        kernel,
        out_shape=jax.ShapeDtypeStruct((num, ncols), jnp.float32),
        grid_spec=grid_spec,
        compiler_params=pltpu.CompilerParams(
            # TODO(synk): evaluate pltpu.CORE_PARALLEL candidate-splitting on
            # v7x (2 TCs) with a per-core output group; single resident output
            # block forces 'arbitrary' on both axes here.
            dimension_semantics=("arbitrary", "arbitrary"),
            vmem_limit_bytes=32 * 1024 * 1024),
        cost_estimate=cost,
    )(stats, xr)

    if mode == "2d":
        sc = scores[:, :nzp]
        k = jnp.argmin(sc)                     # first min: (low i, low zp) wins
        fi = (k // nzp + 1).astype(jnp.float32)
        zf = (k % nzp + quant_min).astype(jnp.float32)
        best_min, best_max = _candidate_bounds_2d(x_min, x_max, fi, zf,
                                                  qrange, num)
    else:
        sc = scores[:, 0]
        k = jnp.argmin(sc)
        fi = (k + 1).astype(jnp.float32)
        best_min, best_max = _candidate_bounds_1d(x_min, x_max, fi, mode, num)
    return best_min, best_max


class AvgMSEFastObserverPallas:
    """JAX/Pallas port of AvgMSEFastObserver (bit=8, symmetric=False, ch_axis=-1)."""

    def __init__(self, bit=8, symmetric=False, ch_axis=-1):
        # TODO(synk): symmetric and per-channel (ch_axis != -1) search paths.
        assert ch_axis == -1 and not symmetric
        self.bit = bit
        self.symmetric = symmetric
        self.ch_axis = ch_axis
        self.quant_min = 0
        self.quant_max = 2 ** bit - 1
        self.p = 2.0
        self.num = _NUM
        self.one_side_dist = None
        self.cnt = 0
        self.min_val = jnp.float32(jnp.inf)    # running buffers
        self.max_val = jnp.float32(-jnp.inf)

    def calculate_qparams(self, min_val, max_val):
        min_neg = jnp.minimum(min_val, 0.0)
        max_pos = jnp.maximum(max_val, 0.0)
        scale = jnp.maximum(
            (max_pos - min_neg) / float(self.quant_max - self.quant_min), 1e-8)
        zero_point = jnp.clip(self.quant_min - jnp.round(min_neg / scale),
                              self.quant_min, self.quant_max).astype(jnp.int32)
        return scale, zero_point

    def __call__(self, x_orig, observation_mask=None, seq_pos=-1):
        if x_orig.size == 0:
            return x_orig
        # TODO(synk): remove_padding / observation_mask (ragged gather) not ported.
        assert observation_mask is None
        x = jnp.asarray(x_orig, jnp.float32)
        x_min = jnp.min(x)                      # device scalars (no host sync)
        x_max = jnp.max(x)
        if self.one_side_dist is None:
            # single host sync, first observation only, to pick the branch
            self.one_side_dist = ('pos' if float(x_min) >= 0.0
                                  else 'neg' if float(x_max) <= 0.0 else 'no')
        mode = '2d' if self.one_side_dist == 'no' else self.one_side_dist
        best_min, best_max = mse_search_pallas(
            x, x_min, x_max, mode=mode, quant_min=self.quant_min,
            quant_max=self.quant_max, num=self.num)
        # AvgMSEFastObserver running-average buffer update (device-side)
        if self.cnt == 0:
            self.min_val = best_min
            self.max_val = best_max
        else:
            self.min_val = self.min_val * self.cnt + best_min
            self.max_val = self.max_val * self.cnt + best_max
        self.cnt += 1
        self.min_val = self.min_val / self.cnt
        self.max_val = self.max_val / self.cnt
        return None   # torch forward returns None and updates buffers


# ------------------------- pure-JAX reference check -------------------------
def _ref_candidates(x_min, x_max, mode, qmin, qmax, num):
    x_min = jnp.float32(x_min)
    x_max = jnp.float32(x_max)
    i = jnp.arange(1, num + 1, dtype=jnp.float32)
    if mode == "2d":
        tmp_max = (x_max - x_min) / num * i
        tmp_delta = tmp_max / float(qmax - qmin)
        zp = jnp.arange(qmin, qmax + 1, dtype=jnp.float32)
        new_min = jnp.maximum(0.0 - zp[None, :] * tmp_delta[:, None], x_min)
        new_max = jnp.minimum(tmp_max[:, None] - zp[None, :] * tmp_delta[:, None],
                              x_max)
        return new_min.reshape(-1), new_max.reshape(-1)
    xrange = jnp.maximum(jnp.abs(x_min), x_max)
    thres = xrange / num * i
    new_min = jnp.zeros_like(thres) if mode == "pos" else -thres
    new_max = jnp.zeros_like(thres) if mode == "neg" else thres
    return new_min, new_max


def _ref_scores(x, new_min, new_max, qmin, qmax, chunk=256):
    xf = x.reshape(-1).astype(jnp.float32)
    qr = float(qmax - qmin)
    min_neg = jnp.minimum(new_min, 0.0)
    max_pos = jnp.maximum(new_max, 0.0)
    scale = jnp.maximum((max_pos - min_neg) / qr, 1e-8)
    zp = jnp.clip(qmin - jnp.round(min_neg / scale), qmin, qmax)
    outs = []
    for s in range(0, new_min.shape[0], chunk):
        sc = scale[s:s + chunk][None, :]
        z = zp[s:s + chunk][None, :]
        q = jnp.clip(jnp.round(xf[:, None] / sc) + z, qmin, qmax)
        xq = (q - z) * sc
        outs.append(jnp.mean((xq - xf[:, None]) ** 2, axis=0))
    return jnp.concatenate(outs)


if __name__ == "__main__":
    key = jax.random.PRNGKey(0)
    x = jax.random.normal(key, (2, 4, 16, 16), dtype=jnp.float32)   # NCHW activation
    x2 = x * 0.5 + 0.1                                              # still mixed-sign
    qmin, qmax, num = 0, 255, _NUM

    # Observer with the AvgMSEFastObserver running-average buffer update.
    obs = AvgMSEFastObserverPallas(bit=8, symmetric=False, ch_axis=-1)
    obs(x)        # mixed sign -> one_side_dist 'no' -> 2D (range x zp) sweep
    obs(x2)       # second observation -> running average of per-call bests
    obs_pos = AvgMSEFastObserverPallas(bit=8, symmetric=False, ch_axis=-1)
    obs_pos(jnp.abs(x))   # non-negative -> one_side_dist 'pos' -> 1D sweep
    jax.block_until_ready((obs.min_val, obs.max_val,
                           obs_pos.min_val, obs_pos.max_val))

    def run_and_check(inp, mode, tile_rows=_TILE_ROWS):
        """Kernel's chosen (min, max) must achieve the best reference score."""
        xm, xM = jnp.min(inp), jnp.max(inp)
        bm, bM = mse_search_pallas(inp, xm, xM, mode=mode, quant_min=qmin,
                                   quant_max=qmax, num=num,
                                   tile_rows=tile_rows)
        nm, nM = _ref_candidates(float(xm), float(xM), mode, qmin, qmax, num)
        s_ref = float(jnp.min(_ref_scores(inp, nm, nM, qmin, qmax)))
        s_ker = float(_ref_scores(inp,
                                  jnp.array([float(bm)], jnp.float32),
                                  jnp.array([float(bM)], jnp.float32),
                                  qmin, qmax)[0])
        assert bool(jnp.isfinite(bm)) and bool(jnp.isfinite(bM))
        assert s_ker <= s_ref * (1 + 1e-4) + 1e-7, (mode, s_ker, s_ref)
        return bm, bM

    b1 = run_and_check(x, "2d")
    b2 = run_and_check(x2, "2d")
    bp = run_and_check(jnp.abs(x), "pos")
    run_and_check(x, "2d", tile_rows=8)        # exercise multi-tile streaming
    run_and_check(jnp.abs(x), "pos", tile_rows=8)

    # AvgMSEFastObserver semantics: buffers hold the running mean of the bests.
    assert jnp.allclose(obs.min_val, (b1[0] + b2[0]) / 2, rtol=1e-6, atol=1e-6)
    assert jnp.allclose(obs.max_val, (b1[1] + b2[1]) / 2, rtol=1e-6, atol=1e-6)
    assert jnp.allclose(obs_pos.min_val, bp[0])
    assert jnp.allclose(obs_pos.max_val, bp[1])

    print("KERNEL_OK")
</pallas_src>

<mosaic_0001>
module attributes {stable_mosaic.version = 11 : i64} {
  func.func @_mse_sweep_kernel(%arg0: i32, %arg1: i32, %arg2: memref<2xf32, #tpu.memory_space<smem>>, %arg3: memref<16x128xf32, #tpu.memory_space<vmem>>, %arg4: memref<100x256xf32, #tpu.memory_space<vmem>>) attributes {dimension_semantics = [#tpu.dimension_semantics<arbitrary>, #tpu.dimension_semantics<arbitrary>], iteration_bounds = array<i64: 1, 100>, scalar_prefetch = 1 : i64, scratch_operands = 0 : i64, tpu.core_type = #tpu.core_type<tc>, window_params = [{transform_indices = @transform_0, window_bounds = array<i64: 16, 128>}, {pipeline_mode = #tpu.pipeline_mode<synchronous>, transform_indices = @transform_1, window_bounds = array<i64: 100, 256>}]} {
    %c0 = arith.constant 0 : index
    %0 = memref.load %arg2[%c0] : memref<2xf32, #tpu.memory_space<smem>>
    %c1 = arith.constant 1 : index
    %1 = memref.load %arg2[%c1] : memref<2xf32, #tpu.memory_space<smem>>
    %c1_i32 = arith.constant 1 : i32
    %2 = arith.addi %arg1, %c1_i32 : i32
    %3 = arith.sitofp %2 : i32 to f32
    %c0_0 = arith.constant 0 : index
    %c0_1 = arith.constant 0 : index
    %4 = vector.load %arg3[%c0_0, %c0_1] : memref<16x128xf32, #tpu.memory_space<vmem>>, vector<16x128xf32>
    %5 = tpu.iota {dimensions = array<i32: 1>} : vector<1x256xi32>
    %cst = arith.constant 0.000000e+00 : f32
    %6 = vector.broadcast %cst : f32 to vector<1x256xf32>
    %c0_i32 = arith.constant 0 : i32
    %c128_i32 = arith.constant 128 : i32
    %7 = arith.addi %c0_i32, %c128_i32 : i32
    %c1_i32_2 = arith.constant 1 : i32
    %8 = scf.for %arg5 = %c0_i32 to %7 step %c1_i32_2 iter_args(%arg6 = %6) -> (vector<1x256xf32>)  : i32 {
      %c2_i32 = arith.constant 2 : i32
      %15 = arith.muli %arg5, %c2_i32 : i32
      %c0_i32_8 = arith.constant 0 : i32
      %16 = arith.addi %15, %c0_i32_8 : i32
      %c0_i32_9 = arith.constant 0 : i32
      %17 = arith.addi %16, %c0_i32_9 : i32
      %18 = arith.sitofp %17 : i32 to f32
      %19 = arith.subf %1, %0 : f32
      %cst_10 = arith.constant 1.000000e+02 : f32
      %20 = arith.divf %19, %cst_10 : f32
      %21 = arith.mulf %20, %3 : f32
      %cst_11 = arith.constant 2.550000e+02 : f32
      %22 = arith.divf %21, %cst_11 : f32
      %23 = arith.mulf %18, %22 : f32
      %cst_12 = arith.constant 0.000000e+00 : f32
      %24 = arith.subf %cst_12, %23 : f32
      %25 = arith.maximumf %24, %0 : f32
      %26 = arith.mulf %18, %22 : f32
      %27 = arith.subf %21, %26 : f32
      %28 = arith.minimumf %27, %1 : f32
      %cst_13 = arith.constant 0.000000e+00 : f32
      %29 = arith.minimumf %25, %cst_13 : f32
      %cst_14 = arith.constant 0.000000e+00 : f32
      %30 = arith.maximumf %28, %cst_14 : f32
      %31 = arith.subf %30, %29 : f32
      %cst_15 = arith.constant 2.550000e+02 : f32
      %32 = arith.divf %31, %cst_15 : f32
      %cst_16 = arith.constant 9.99999993E-9 : f32
      %33 = arith.maximumf %32, %cst_16 : f32
      %cst_17 = arith.constant 1.000000e+00 : f32
      %34 = arith.divf %cst_17, %33 : f32
      %35 = arith.divf %29, %33 : f32
      %36 = math.roundeven %35 : f32
      %cst_18 = arith.constant 0.000000e+00 : f32
      %37 = arith.subf %cst_18, %36 : f32
      %c0_i32_19 = arith.constant 0 : i32
      %c255_i32 = arith.constant 255 : i32
      %38 = arith.sitofp %c0_i32_19 : i32 to f32
      %39 = arith.maximumf %38, %37 : f32
      %40 = arith.sitofp %c255_i32 : i32 to f32
      %41 = arith.minimumf %40, %39 : f32
      %cst_20 = arith.constant 0.000000e+00 : f32
      %42 = arith.subf %cst_20, %41 : f32
      %cst_21 = arith.constant 2.550000e+02 : f32
      %43 = arith.subf %cst_21, %41 : f32
      %44 = vector.broadcast %34 : f32 to vector<16x128xf32>
      %45 = arith.mulf %4, %44 : vector<16x128xf32>
      %46 = math.roundeven %45 : vector<16x128xf32>
      %47 = vector.broadcast %42 : f32 to vector<16x128xf32>
      %48 = arith.maximumf %47, %46 : vector<16x128xf32>
      %49 = vector.broadcast %43 : f32 to vector<16x128xf32>
      %50 = arith.minimumf %49, %48 : vector<16x128xf32>
      %51 = arith.subf %50, %45 : vector<16x128xf32>
      %52 = arith.mulf %51, %51 : vector<16x128xf32>
      %53 = vector.shape_cast %52 : vector<16x128xf32> to vector<1x16x128xf32>
      %cst_22 = arith.constant dense<0.000000e+00> : vector<1xf32>
      %54 = vector.multi_reduction <add>, %53, %cst_22 [1, 2] : vector<1x16x128xf32> to vector<1xf32>
      %55 = vector.shape_cast %54 : vector<1xf32> to vector<1x1x1xf32>
      %56 = vector.extract %55[0, 0, 0] : f32 from vector<1x1x1xf32>
      %57 = arith.mulf %33, %33 : f32
      %cst_23 = arith.constant 4.8828125E-4 : f32
      %58 = arith.mulf %57, %cst_23 : f32
      %59 = arith.mulf %56, %58 : f32
      %60 = vector.broadcast %16 : i32 to vector<1x256xi32>
      %61 = arith.cmpi eq, %5, %60 : vector<1x256xi32>
      %62 = vector.broadcast %59 : f32 to vector<1x256xf32>
      %63 = arith.select %61, %62, %arg6 : vector<1x256xi1>, vector<1x256xf32>
      %c1_i32_24 = arith.constant 1 : i32
      %64 = arith.addi %15, %c1_i32_24 : i32
      %c0_i32_25 = arith.constant 0 : i32
      %65 = arith.addi %64, %c0_i32_25 : i32
      %66 = arith.sitofp %65 : i32 to f32
      %67 = arith.subf %1, %0 : f32
      %cst_26 = arith.constant 1.000000e+02 : f32
      %68 = arith.divf %67, %cst_26 : f32
      %69 = arith.mulf %68, %3 : f32
      %cst_27 = arith.constant 2.550000e+02 : f32
      %70 = arith.divf %69, %cst_27 : f32
      %71 = arith.mulf %66, %70 : f32
      %cst_28 = arith.constant 0.000000e+00 : f32
      %72 = arith.subf %cst_28, %71 : f32
      %73 = arith.maximumf %72, %0 : f32
      %74 = arith.mulf %66, %70 : f32
      %75 = arith.subf %69, %74 : f32
      %76 = arith.minimumf %75, %1 : f32
      %cst_29 = arith.constant 0.000000e+00 : f32
      %77 = arith.minimumf %73, %cst_29 : f32
      %cst_30 = arith.constant 0.000000e+00 : f32
      %78 = arith.maximumf %76, %cst_30 : f32
      %79 = arith.subf %78, %77 : f32
      %cst_31 = arith.constant 2.550000e+02 : f32
      %80 = arith.divf %79, %cst_31 : f32
      %cst_32 = arith.constant 9.99999993E-9 : f32
      %81 = arith.maximumf %80, %cst_32 : f32
      %cst_33 = arith.constant 1.000000e+00 : f32
      %82 = arith.divf %cst_33, %81 : f32
      %83 = arith.divf %77, %81 : f32
      %84 = math.roundeven %83 : f32
      %cst_34 = arith.constant 0.000000e+00 : f32
      %85 = arith.subf %cst_34, %84 : f32
      %c0_i32_35 = arith.constant 0 : i32
      %c255_i32_36 = arith.constant 255 : i32
      %86 = arith.sitofp %c0_i32_35 : i32 to f32
      %87 = arith.maximumf %86, %85 : f32
      %88 = arith.sitofp %c255_i32_36 : i32 to f32
      %89 = arith.minimumf %88, %87 : f32
      %cst_37 = arith.constant 0.000000e+00 : f32
      %90 = arith.subf %cst_37, %89 : f32
      %cst_38 = arith.constant 2.550000e+02 : f32
      %91 = arith.subf %cst_38, %89 : f32
      %92 = vector.broadcast %82 : f32 to vector<16x128xf32>
      %93 = arith.mulf %4, %92 : vector<16x128xf32>
      %94 = math.roundeven %93 : vector<16x128xf32>
      %95 = vector.broadcast %90 : f32 to vector<16x128xf32>
      %96 = arith.maximumf %95, %94 : vector<16x128xf32>
      %97 = vector.broadcast %91 : f32 to vector<16x128xf32>
      %98 = arith.minimumf %97, %96 : vector<16x128xf32>
      %99 = arith.subf %98, %93 : vector<16x128xf32>
      %100 = arith.mulf %99, %99 : vector<16x128xf32>
      %101 = vector.shape_cast %100 : vector<16x128xf32> to vector<1x16x128xf32>
      %cst_39 = arith.constant dense<0.000000e+00> : vector<1xf32>
      %102 = vector.multi_reduction <add>, %101, %cst_39 [1, 2] : vector<1x16x128xf32> to vector<1xf32>
      %103 = vector.shape_cast %102 : vector<1xf32> to vector<1x1x1xf32>
      %104 = vector.extract %103[0, 0, 0] : f32 from vector<1x1x1xf32>
      %105 = arith.mulf %81, %81 : f32
      %cst_40 = arith.constant 4.8828125E-4 : f32
      %106 = arith.mulf %105, %cst_40 : f32
      %107 = arith.mulf %104, %106 : f32
      %108 = vector.broadcast %64 : i32 to vector<1x256xi32>
      %109 = arith.cmpi eq, %5, %108 : vector<1x256xi32>
      %110 = vector.broadcast %107 : f32 to vector<1x256xf32>
      %111 = arith.select %109, %110, %63 : vector<1x256xi1>, vector<1x256xf32>
      scf.yield %111 : vector<1x256xf32>
    }
    %c128_i32_3 = arith.constant 128 : i32
    %c0_i32_4 = arith.constant 0 : i32
    %9 = arith.cmpi eq, %arg0, %c0_i32_4 : i32
    %10 = arith.extui %9 : i1 to i32
    %c0_i32_5 = arith.constant 0 : i32
    %11 = arith.cmpi ne, %10, %c0_i32_5 : i32
    scf.if %11 {
      %15 = arith.index_cast %arg1 : i32 to index
      %c0_8 = arith.constant 0 : index
      %16 = vector.load %arg4[%15, %c0_8] : memref<100x256xf32, #tpu.memory_space<vmem>>, vector<1x256xf32>
      tpu.vector_store %arg4[%15, %c0_8], %8 {strides = array<i32>} : memref<100x256xf32, #tpu.memory_space<vmem>>, vector<1x256xf32>,
    } else {
    }
    %c0_i32_6 = arith.constant 0 : i32
    %12 = arith.cmpi sgt, %arg0, %c0_i32_6 : i32
    %13 = arith.extui %12 : i1 to i32
    %c0_i32_7 = arith.constant 0 : i32
    %14 = arith.cmpi ne, %13, %c0_i32_7 : i32
    scf.if %14 {
      %15 = arith.index_cast %arg1 : i32 to index
      %c0_8 = arith.constant 0 : index
      %16 = vector.load %arg4[%15, %c0_8] : memref<100x256xf32, #tpu.memory_space<vmem>>, vector<1x256xf32>
      %17 = arith.addf %16, %8 : vector<1x256xf32>
      %18 = arith.index_cast %arg1 : i32 to index
      %c0_9 = arith.constant 0 : index
      %19 = vector.load %arg4[%18, %c0_9] : memref<100x256xf32, #tpu.memory_space<vmem>>, vector<1x256xf32>
      tpu.vector_store %arg4[%18, %c0_9], %17 {strides = array<i32>} : memref<100x256xf32, #tpu.memory_space<vmem>>, vector<1x256xf32>,
    } else {
    }
    return
  }
  func.func @transform_0(%arg0: i32, %arg1: i32, %arg2: memref<2xf32, #tpu.memory_space<smem>>) -> (i32, i32) {
    %c0_i32 = arith.constant 0 : i32
    %c0_i32_0 = arith.constant 0 : i32
    return %arg0, %c0_i32 : i32, i32
  }
  func.func @transform_1(%arg0: i32, %arg1: i32, %arg2: memref<2xf32, #tpu.memory_space<smem>>) -> (i32, i32) {
    %c0_i32 = arith.constant 0 : i32
    %c0_i32_0 = arith.constant 0 : i32
    %c0_i32_1 = arith.constant 0 : i32
    return %c0_i32, %c0_i32_0 : i32, i32
  }
}

</mosaic_0001>

<llo_original>
// kernel: mse_search_pallas.1
$region0: #{mse_search_pallas.1}
  #allocation0 [shape = 'u32[]', space=smem, size = 0x4, offset = 0x4, fixed_abs, tag = 'smem constant byte address 0x4 - core index']
  #allocation1 [shape = 'u32[144,128]{1,0:T(1,128)}', space=vmem, size = 0x12000, scoped, tag = 'internal scratch']
  #allocation2 [shape = 's32[1]{0}', space=sflag, size = 0x4, scoped, tag = 'scoped memory for mse_search_pallas.1']
  #allocation3 [shape = 'u8[512]{0}', space=smem, size = 0x200, scoped, tag = 'prefetched SMEM operand 0']
  %s0 = inlined_call_operand.vmem [shape: f32[2], index: 0, kind: input, shape index: {}]
  %s1 = inlined_call_operand.vmem [shape: f32[16,128], index: 1, kind: input, shape index: {}]
  %s2 = inlined_call_operand.vmem [shape: f32[100,256], index: 2, kind: output, shape index: {}]
  %s3 = sld [smem:[#allocation0]]
  $region52: #{mse_search_pallas.1} parent=0
    _
  %s5 = ssub.s32 1, %s3
  %s6 = scalar_select 0, %s5, %s3
  %s7 = sshll.u32 %s0, 4
  %s8 = int_to_ptr.vmem [resolvable:$true] %s7
  %10 = dma.vmem_to_smem %s8, 16, [#allocation3], [#allocation2]
  %11 = dma.done [#allocation2], 16
  %12 = sfence
  loop: start=0, step=1, limit=102
  $region2: #{mse_search_pallas.1} parent=0 // loop_pre_header
    _
  $region3: #{mse_search_pallas.1} parent=0 // loop_header
    %s14 = sphi 0, %s18
    %p15 = scmp.ge.s32.totalorder %s14, 102
    %s21 = sphi 0, %s33
    %s22 = sphi 0, %s29
    %s23 = sphi 0, %s21
    %s24 = sphi 0, %s22
    %s25 = sphi 0, %s23
    %s26 = sphi 0, %s24
    %s36 = sphi 0, %s38
    %s39 = sphi 0, %s36
    %s40 = sphi 0, %s39
    %s56 = sphi 0, %s40
    %s60 = sphi 0, %s60
    %s62 = sphi 0, %s60
    %s63 = sphi 0, %s62
    %s77 = sphi 0, %s63
  $region4: #{mse_search_pallas.1} parent=0 // loop_header_branch
    %17 = sbr.rel (%p15) target = $region8
  $region5: #{mse_search_pallas.1} parent=0 // loop_body
    %s19 = ssub.s32 %s14, 1
    %s20 = ssub.s32 %s14, 2
    %s27 = sadd.s32 1, %s22
    %p28 = scmp.ge.s32.totalorder %s27, 100
    %s29 = scalar_select %p28, 0, %s27
    %s30 = sadd.s32 1, %s21
    %s31 = scalar_select %p28, %s30, %s21
    %p32 = scmp.ge.s32.totalorder %s31, 1
    %s33 = scalar_select %p32, 0, %s31
    %s34 = ssub.s32 %s21, %s33
    %p35 = scmp.eq.s32.totalorder %s34, 0
    %s37 = sadd.s32 %s36, 1
    %s38 = scalar_select %p35, %s36, %s37
    %p41 = pneg %p35
    %p42 = scmp.eq.s32.totalorder %s14, 99
    %p43 = por %p41, %p42
    %p44 = scmp.ne.s32.totalorder %s36, %s39
    %p45 = scmp.eq.s32.totalorder %s14, 0
    %p46 = por %p44, %p45
    %p47 = scmp.ne.s32.totalorder %s36, %s39
    %p48 = scmp.eq.s32.totalorder %s19, 99
    %p49 = por %p47, %p48
    %p50 = scmp.ne.s32.totalorder %s39, %s40
    %p51 = scmp.eq.s32.totalorder %s19, 0
    %p52 = por %p50, %p51
    %p53 = scmp.ne.s32.totalorder %s39, %s40
    %p54 = scmp.eq.s32.totalorder %s20, 99
    %p55 = por %p53, %p54
    %p57 = scmp.ne.s32.totalorder %s40, %s56
    %p58 = scmp.eq.s32.totalorder %s20, 0
    %p59 = por %p57, %p58
    %s61 = sadd.s32 %s60, 1
    %p64 = scmp.eq.s32.totalorder %s14, 99
    %p65 = scmp.ne.s32.totalorder %s60, %s62
    %p66 = scmp.eq.s32.totalorder %s14, 0
    %p67 = por %p65, %p66
    %p68 = scmp.ne.s32.totalorder %s60, %s62
    %p69 = scmp.eq.s32.totalorder %s19, 99
    %p70 = por %p68, %p69
    %p71 = scmp.ne.s32.totalorder %s62, %s63
    %p72 = scmp.eq.s32.totalorder %s19, 0
    %p73 = por %p71, %p72
    %p74 = scmp.ne.s32.totalorder %s62, %s63
    %p75 = scmp.eq.s32.totalorder %s20, 99
    %p76 = por %p74, %p75
    %p78 = scmp.ne.s32.totalorder %s63, %s77
    %p79 = scmp.eq.s32.totalorder %s20, 0
    %p80 = por %p78, %p79
    %p81 = scmp.le.s32.totalorder 1, %s14
    %p82 = scmp.lt.s32.totalorder %s14, 101
    %p83 = pnand %p81, %p82
    %p84 = pneg %p83
    // Predicated region
    $region9: #{mse_search_pallas.1} parent=5 // pred_check
      _
    $region10: #{mse_search_pallas.1} parent=5 // pred_check_branch
      %86 = sbr.rel (%p83) target = $region12
    $region11: #{mse_search_pallas.1} parent=5 // pred_region
      %s87 = ssub.s32 %s14, 1
      // Predicated region
      $region13: #{mse_search_pallas.1} parent=11 // pred_check
        %p88 = pneg %p52
      $region14: #{mse_search_pallas.1} parent=11 // pred_check_branch
        %90 = sbr.rel (%p88) target = $region16
      $region15: #{mse_search_pallas.1} parent=11 // pred_region
        %s91 = smul.u32 2, %s23
        %p92 = scmp.lt.s32.totalorder %s91, 1
        %s93 = scalar_select %p92, %s91, 1
        %s94 = smul.addr %s93, 8
        %s95 = scalar_lea.vmem %s1, %s94
        %s96 = smul.u32 2, %s23
      $region16: #{mse_search_pallas.1} parent=11 // pred_fallthru
        _
    $region12: #{mse_search_pallas.1} parent=5 // pred_fallthru
      _
    %p97 = scmp.lt.s32.totalorder %s14, 100
    // Predicated region
    $region17: #{mse_search_pallas.1} parent=5 // pred_check
      %p98 = pneg %p97
    $region18: #{mse_search_pallas.1} parent=5 // pred_check_branch
      %100 = sbr.rel (%p98) target = $region20
    $region19: #{mse_search_pallas.1} parent=5 // pred_region
      _
    $region20: #{mse_search_pallas.1} parent=5 // pred_fallthru
      _
    %p101 = scmp.le.s32.totalorder 1, %s14
    %p102 = scmp.lt.s32.totalorder %s14, 101
    %p103 = pnand %p101, %p102
    %p104 = pneg %p103
    // Predicated region
    $region21: #{mse_search_pallas.1} parent=5 // pred_check
      _
    $region22: #{mse_search_pallas.1} parent=5 // pred_check_branch
      %106 = sbr.rel (%p103) target = $region24
    $region23: #{mse_search_pallas.1} parent=5 // pred_region
      %s107 = ssub.s32 %s14, 1
      %s108 = smul.u32 2, %s23
      %p109 = scmp.lt.s32.totalorder %s108, 1
      %s110 = scalar_select %p109, %s108, 1
      %s111 = smul.addr %s110, 8
      %s112 = scalar_lea.vmem %s1, %s111
      %p113 = pneg %p52
      %p114 = pneg %p49
      %p115 = pneg %p73
      %p116 = pneg %p70
      %s117 = smul.u32 2, %s23
      %p118 = scmp.lt.s32.totalorder %s117, 1
      %s119 = scalar_select %p118, %s117, 1
      %s120 = smul.addr %s119, 8
      %s121 = scalar_lea.vmem %s1, %s120
      %s122 = smul.u32 2, %s23
      %s123 = sld [smem:[#allocation3]]
      %s124 = sld [smem:[#allocation3 + $0x1]]
      %s125 = sadd.s32 %s24, 1
      %s126 = scvt.s32.f32 %s125
      %v127 = vld [vmem:[%s121] sm:$0xff]
      %v128 = vld [vmem:[%s121 + $0x8] sm:$0xff]
      %v129 = vlaneseq
      %v130 = vand.u32 %v129, 127
      %v131 = vadd.s32 %v130, 128
      loop: start=0, step=1, limit=128
      $region25: #{mse_search_pallas.1} parent=23 // loop_pre_header
        _
      $region26: #{mse_search_pallas.1} parent=23 // loop_header
        %s133 = sphi 0, %s137
        %p134 = scmp.ge.s32.totalorder %s133, 128
        %v138 = vphi 0.0, %v282
        %v139 = vphi 0.0, %v283
      $region27: #{mse_search_pallas.1} parent=23 // loop_header_branch
        %136 = sbr.rel (%p134) target = $region31
      $region28: #{mse_search_pallas.1} parent=23 // loop_body
        %s140 = smul.u32 %s133, 2
        %s141 = scvt.s32.f32 %s140
        %s142 = ssub.f32 %s124, %s123
        %v143 = vrcp.pop 100.0
        %s144 = vtos %v143
        %s145 = smul.f32 %s142, %s144
        %s146 = smul.f32 %s145, %s126
        %v147 = vrcp.pop 255.0
        %s148 = vtos %v147
        %s149 = smul.f32 %s146, %s148
        %s150 = smul.f32 %s141, %s149
        %s151 = ssub.f32 0.0, %s150
        %s152 = smax.f32 %s151, %s123
        %s153 = ssub.f32 %s146, %s150
        %s154 = smin.f32 %s153, %s124
        %s155 = smin.f32 %s152, 0.0
        %s156 = smax.f32 %s154, 0.0
        %s157 = ssub.f32 %s156, %s155
        %v158 = vrcp.pop 255.0
        %s159 = vtos %v158
        %s160 = smul.f32 %s157, %s159
        %s161 = smax.f32 %s160, 1e-08
        %v162 = vstv %s161
        %v163 = vrcp.pop %v162
        %s164 = vtos %v163
        %v165 = vstv %s161
        %v166 = vrcp.pop %v165
        %s167 = vtos %v166
        %s168 = smul.f32 %s155, %s167
        %s169 = scvt.f32.s32 %s168
        %s170 = scvt.s32.f32 %s169
        %s171 = sand.u32 2147483647, %s170
        %s172 = sand.u32 %s168, 2147483648
        %s173 = sor.u32 %s171, %s172
        %s174 = sand.u32 2147483647, %s168
        %p175 = scmp.lt.f32.partialorder %s174, 2.1474836e+09
        %s176 = scalar_select %p175, %s173, %s168
        %s177 = ssub.f32 0.0, %s176
        %s178 = smax.f32 %s177, 0.0
        %s179 = smin.f32 %s178, 255.0
        %s180 = ssub.f32 0.0, %s179
        %s181 = ssub.f32 255.0, %s179
        %v182 = vstv %s164
        %v183 = vmul.f32 %v127, %v182
        %v184 = vmul.f32 %v128, %v182
        %v185 = vround.ne.pseudo %v183
        %v186 = vround.ne.pseudo %v184
        %v187 = vstv %s180
        %v188 = vmax.f32 %v187, %v185
        %v189 = vmax.f32 %v187, %v186
        %v190 = vstv %s181
        %v191 = vmin.f32 %v190, %v188
        %v192 = vmin.f32 %v190, %v189
        %v193 = vsub.f32 %v191, %v183
        %v194 = vsub.f32 %v192, %v184
        %v195 = vmul.f32 %v193, %v193
        %v196 = vmul.f32 %v194, %v194
        %v197 = vadd.f32 %v195, %v196
        %198 = vadd.xlane.f32.xlu0 %v197
        %v199 = vpop.xlane.xlu0 %198
        %v200 = vrot.slane %v199, 4
        %v201 = vadd.f32 %v199, %v200
        %v202 = vrot.slane %v201, 2
        %v203 = vadd.f32 %v201, %v202
        %v204 = vrot.slane %v203, 1
        %v205 = vadd.f32 %v203, %v204
        %s206 = vtos %v205
        %s207 = smul.f32 %s161, %s161
        %s208 = smul.f32 %s207, 0.00048828125
        %s209 = smul.f32 %s206, %s208
        %v210 = vstv %s140
        %vm211 = vcmp.eq.s32.totalorder %v130, %v210
        %vm212 = vcmp.eq.s32.totalorder %v131, %v210
        %v213 = vstv %s209
        %v214 = vsel %vm211, %v213, %v138
        %v215 = vsel %vm212, %v213, %v139
        %s216 = sadd.s32 %s140, 1
        %s217 = scvt.s32.f32 %s216
        %s218 = smul.f32 %s217, %s149
        %s219 = ssub.f32 0.0, %s218
        %s220 = smax.f32 %s219, %s123
        %s221 = ssub.f32 %s146, %s218
        %s222 = smin.f32 %s221, %s124
        %s223 = smin.f32 %s220, 0.0
        %s224 = smax.f32 %s222, 0.0
        %s225 = ssub.f32 %s224, %s223
        %v226 = vrcp.pop 255.0
        %s227 = vtos %v226
        %s228 = smul.f32 %s225, %s227
        %s229 = smax.f32 %s228, 1e-08
        %v230 = vstv %s229
        %v231 = vrcp.pop %v230
        %s232 = vtos %v231
        %v233 = vstv %s229
        %v234 = vrcp.pop %v233
        %s235 = vtos %v234
        %s236 = smul.f32 %s223, %s235
        %s237 = scvt.f32.s32 %s236
        %s238 = scvt.s32.f32 %s237
        %s239 = sand.u32 2147483647, %s238
        %s240 = sand.u32 %s236, 2147483648
        %s241 = sor.u32 %s239, %s240
        %s242 = sand.u32 2147483647, %s236
        %p243 = scmp.lt.f32.partialorder %s242, 2.1474836e+09
        %s244 = scalar_select %p243, %s241, %s236
        %s245 = ssub.f32 0.0, %s244
        %s246 = smax.f32 %s245, 0.0
        %s247 = smin.f32 %s246, 255.0
        %s248 = ssub.f32 0.0, %s247
        %s249 = ssub.f32 255.0, %s247
        %v250 = vstv %s232
        %v251 = vmul.f32 %v127, %v250
        %v252 = vmul.f32 %v128, %v250
        %v253 = vround.ne.pseudo %v251
        %v254 = vround.ne.pseudo %v252
        %v255 = vstv %s248
        %v256 = vmax.f32 %v255, %v253
        %v257 = vmax.f32 %v255, %v254
        %v258 = vstv %s249
        %v259 = vmin.f32 %v258, %v256
        %v260 = vmin.f32 %v258, %v257
        %v261 = vsub.f32 %v259, %v251
        %v262 = vsub.f32 %v260, %v252
        %v263 = vmul.f32 %v261, %v261
        %v264 = vmul.f32 %v262, %v262
        %v265 = vadd.f32 %v263, %v264
        %266 = vadd.xlane.f32.xlu0 %v265
        %v267 = vpop.xlane.xlu0 %266
        %v268 = vrot.slane %v267, 4
        %v269 = vadd.f32 %v267, %v268
        %v270 = vrot.slane %v269, 2
        %v271 = vadd.f32 %v269, %v270
        %v272 = vrot.slane %v271, 1
        %v273 = vadd.f32 %v271, %v272
        %s274 = vtos %v273
        %s275 = smul.f32 %s229, %s229
        %s276 = smul.f32 %s275, 0.00048828125
        %s277 = smul.f32 %s274, %s276
        %v278 = vstv %s216
        %vm279 = vcmp.eq.s32.totalorder %v130, %v278
        %vm280 = vcmp.eq.s32.totalorder %v131, %v278
        %v281 = vstv %s277
        %v282 = vsel %vm279, %v281, %v214
        %v283 = vsel %vm280, %v281, %v215
      $region29: #{mse_search_pallas.1} parent=23 // loop_footer
        %s137 = sadd.s32 1, %s133
      $region30: #{mse_search_pallas.1} parent=23 // loop_footer_branch
        %132 = sbr.rel target = $region26
      $region31: #{mse_search_pallas.1} parent=23 // loop_exit
        _
      %p284 = scmp.eq.s32.totalorder %s23, 0
      // Predicated region
      $region32: #{mse_search_pallas.1} parent=23 // pred_check
        %p285 = pneg %p284
      $region33: #{mse_search_pallas.1} parent=23 // pred_check_branch
        %287 = sbr.rel (%p285) target = $region35
      $region34: #{mse_search_pallas.1} parent=23 // pred_region
        %v290 = vcombine.low %v138, %v139
        %v292 = vunpack.c.l.s4 1966171168
        %v293 = vunpack.c.0.s8 %v292
        %v294 = vlaneseq
        %v295 = vshrl.u32 %v294, 7
        %v296 = vsub.s32 %v293, %v295
        %v297 = vrot.slane %v290, %v296
        %v299 = vunpack.c.l.s4 1966171168
        %v300 = vunpack.c.0.s8 %v299
        %v301 = vlaneseq
        %v302 = vshrl.u32 %v301, 7
        %v303 = vsub.s32 %v300, %v302
        %v304 = vrot.slane %v297, %v303
        %v306 = vlaneseq
        %vm307 = vcmp.ge.s32.totalorder %v306, 0
        %vm308 = vcmp.lt.s32.totalorder %v306, 256
        %vm309 = vmand %vm307, %vm308
        %s310 = sshra.s32 %s24, 3
        %s311 = sand.u32 %s24, 7
        %s312 = sshra.s32 %s24, 3
        %s313 = sand.u32 %s24, 7
        %s314 = smul.u32 %s310, 2
        %s315 = smul.u32 %s314, 8
        %s316 = sadd.s32 %s315, %s313
        %s317 = scalar_lea.vmem %s2, %s316
        %318 = vst.msk [vmem:[%s317] ss:$8 sm:$0x3] %vm309, %v304
        %319 = vst.msk [vmem:[%s317] ss:$8 sm:$0x0] %vm309, %v304
      $region35: #{mse_search_pallas.1} parent=23 // pred_fallthru
        _
      %p320 = scmp.gt.s32.totalorder %s23, 0
      // Predicated region
      $region36: #{mse_search_pallas.1} parent=23 // pred_check
        %p321 = pneg %p320
      $region37: #{mse_search_pallas.1} parent=23 // pred_check_branch
        %323 = sbr.rel (%p321) target = $region39
      $region38: #{mse_search_pallas.1} parent=23 // pred_region
        %s324 = sshra.s32 %s24, 3
        %s325 = sand.u32 %s24, 7
        %s326 = sshra.s32 %s24, 3
        %s327 = sand.u32 %s24, 7
        %s328 = smul.u32 %s324, 2
        %s329 = smul.u32 %s328, 8
        %s330 = sadd.s32 %s329, %s327
        %s331 = scalar_lea.vmem %s2, %s330
        %v332 = vld [vmem:[%s331] ss:$8 sm:$0x3]
        %v335 = vcombine.low %v138, %v139
        %v337 = vunpack.c.l.s4 1966171168
        %v338 = vunpack.c.0.s8 %v337
        %v339 = vlaneseq
        %v340 = vshrl.u32 %v339, 7
        %v341 = vsub.s32 %v338, %v340
        %v342 = vrot.slane %v335, %v341
        %v344 = vunpack.c.l.s4 1966171168
        %v345 = vunpack.c.0.s8 %v344
        %v346 = vlaneseq
        %v347 = vshrl.u32 %v346, 7
        %v348 = vsub.s32 %v345, %v347
        %v349 = vrot.slane %v342, %v348
        %v351 = vadd.f32 %v332, %v349
        %v352 = vlaneseq
        %vm353 = vcmp.ge.s32.totalorder %v352, 0
        %vm354 = vcmp.lt.s32.totalorder %v352, 256
        %vm355 = vmand %vm353, %vm354
        %356 = vst.msk [vmem:[%s331] ss:$8 sm:$0x3] %vm355, %v351
        %357 = vst.msk [vmem:[%s331] ss:$8 sm:$0x0] %vm355, %v351
      $region39: #{mse_search_pallas.1} parent=23 // pred_fallthru
        _
      // Predicated region
      $region40: #{mse_search_pallas.1} parent=23 // pred_check
        %p358 = pneg %p70
      $region41: #{mse_search_pallas.1} parent=23 // pred_check_branch
        %360 = sbr.rel (%p358) target = $region43
      $region42: #{mse_search_pallas.1} parent=23 // pred_region
        _
      $region43: #{mse_search_pallas.1} parent=23 // pred_fallthru
        _
      // Predicated region
      $region44: #{mse_search_pallas.1} parent=23 // pred_check
        %p361 = pneg %p70
      $region45: #{mse_search_pallas.1} parent=23 // pred_check_branch
        %363 = sbr.rel (%p361) target = $region47
      $region46: #{mse_search_pallas.1} parent=23 // pred_region
        _
      $region47: #{mse_search_pallas.1} parent=23 // pred_fallthru
        _
    $region24: #{mse_search_pallas.1} parent=5 // pred_fallthru
      _
    %p364 = scmp.le.s32.totalorder 2, %s14
    // Predicated region
    $region48: #{mse_search_pallas.1} parent=5 // pred_check
      %p365 = pneg %p364
    $region49: #{mse_search_pallas.1} parent=5 // pred_check_branch
      %367 = sbr.rel (%p365) target = $region51
    $region50: #{mse_search_pallas.1} parent=5 // pred_region
      %s368 = ssub.s32 %s14, 2
    $region51: #{mse_search_pallas.1} parent=5 // pred_fallthru
      _
  $region6: #{mse_search_pallas.1} parent=0 // loop_footer
    %s18 = sadd.s32 1, %s14
  $region7: #{mse_search_pallas.1} parent=0 // loop_footer_branch
    %13 = sbr.rel target = $region3
  $region8: #{mse_search_pallas.1} parent=0 // loop_exit
    _

</llo_original>
